<compile_context>
chip_gen: v7x
topology: tpu7x:2x2x1
jax: 0.10.0
libtpu: 0.0.40
codegen_flags: <defaults>
</compile_context>

<pallas_src>
import jax
import jax.numpy as jnp
from jax.experimental import pallas as pl
from jax.experimental.pallas import tpu as pltpu


def _cdiv(a, b):
    return -(-a // b)


def _round_down_to(x, m):
    return max(m, (x // m) * m)


# ----------------------------- Pallas kernel ------------------------------- #
def _conv1x1_kernel(x_ref, w_ref, b_ref, o_ref):
    # x_ref: (TB, Cin, TS)  w_ref: (Cout, Cin)  b_ref: (Cout, 1)  o_ref: (TB, Cout, TS)
    tb = x_ref.shape[0]
    w = w_ref[...]                               # loop-invariant, stays in vregs
    b = b_ref[...].astype(jnp.float32)           # (Cout, 1), broadcast over lanes

    def compute_one(i):
        acc = jnp.dot(w, x_ref[i], preferred_element_type=jnp.float32)
        o_ref[i] = (acc + b).astype(o_ref.dtype)

    if tb <= 16:
        # Fully unrolled: gives the LLO scheduler full visibility.
        for i in range(tb):
            compute_one(i)
    else:
        # Large batch blocks: bounded code size, partially unrolled so the loop
        # overhead stays well under the per-step HBM DMA time (mem-bound).
        def body(i, carry):
            compute_one(i)
            return carry
        jax.lax.fori_loop(0, tb, body, 0, unroll=8)


# ------------------------------- Host wrapper ------------------------------ #
_TARGET_STEP_BYTES = 8 * 1024 * 1024   # x + out bytes per grid step (Pallas double-buffers)
_VMEM_LIMIT_BYTES = 32 * 1024 * 1024   # > v5e 16 MiB scoped default, <= v7x 64 MiB physical


def _conv1x1_spatial_last(x3d, weight, bias):
    """x3d: (N, Cin, S) NCHW-flattened; weight: (Cout, Cin); bias: (Cout,)."""
    n, cin, s = x3d.shape
    cout = weight.shape[0]
    itemsize = jnp.dtype(x3d.dtype).itemsize
    per_elem_bytes = (cin + cout) * itemsize
    target_elems = max(128, _TARGET_STEP_BYTES // per_elem_bytes)

    if s >= target_elems:
        # Large images: tile the (lane) spatial axis, one image per step.
        tile_s = _round_down_to(target_elems, 128)
        tb = 1
    else:
        # Small images: full spatial axis, block the batch axis so the per-step
        # DMA burst is multi-MiB (amortizes the ~0.35 us per-step overhead).
        tile_s = s
        tb = max(1, min(n, target_elems // max(s, 1)))
        # v7x megacore occupancy: avoid collapsing the grid to 1-3 iterations
        # when the batch allows >= min(n, 4) blocks (v5e/v6e unaffected).
        if _cdiv(n, tb) * _cdiv(s, tile_s) < 4 and n >= 2:
            tb = min(tb, _cdiv(n, min(n, 4)))

    grid = (_cdiv(n, tb), _cdiv(s, tile_s))

    cost = pl.CostEstimate(
        flops=2 * n * s * cin * cout,
        transcendentals=0,
        bytes_accessed=n * s * (cin + cout) * itemsize
        + (cout * cin + cout) * jnp.dtype(weight.dtype).itemsize,
    )

    return pl.pallas_call(
        _conv1x1_kernel,
        out_shape=jax.ShapeDtypeStruct((n, cout, s), x3d.dtype),
        grid_spec=pltpu.PrefetchScalarGridSpec(
            num_scalar_prefetch=0,
            grid=grid,
            in_specs=[
                # Lane-dense x block; batch is a real blocked dim now.
                pl.BlockSpec((tb, cin, tile_s), lambda bi, si: (bi, 0, si)),
                pl.BlockSpec((cout, cin), lambda bi, si: (0, 0)),   # VMEM-resident
                pl.BlockSpec((cout, 1), lambda bi, si: (0, 0)),     # VMEM-resident
            ],
            out_specs=pl.BlockSpec((tb, cout, tile_s), lambda bi, si: (bi, 0, si)),
        ),
        compiler_params=pltpu.CompilerParams(
            dimension_semantics=("parallel", "parallel"),
            vmem_limit_bytes=_VMEM_LIMIT_BYTES,
        ),
        cost_estimate=cost,
    )(x3d, weight, bias.reshape(cout, 1))


# ------------------------------ Module wrapper ----------------------------- #
class ImageDecoderConv1x1:
    """JAX/Pallas port of the PyTorch ImageDecoderConv1x1 module."""

    def __init__(self, spatial_upsample: int = 1, output_channels: int = -1,
                 input_channels: int = 12, *, key=None, dtype=jnp.float32):
        if output_channels == -1:
            raise ValueError("Expected value for output_channels")
        self.spatial_upsample = spatial_upsample
        self.input_channels = input_channels
        self.output_channels = output_channels

        # Deterministic init mimicking torch.nn.Conv2d default
        # (uniform in [-1/sqrt(fan_in), 1/sqrt(fan_in)]), fan_in = Cin * 1 * 1.
        if key is None:
            key = jax.random.PRNGKey(0)
        k_w, k_b = jax.random.split(key)
        bound = 1.0 / (input_channels ** 0.5)
        # weight stored PyTorch-style as (Cout, Cin) for the (Cout,Cin)@(Cin,S) matmul
        self.weight = jax.random.uniform(
            k_w, (output_channels, input_channels), dtype=dtype,
            minval=-bound, maxval=bound)
        self.bias = jax.random.uniform(
            k_b, (output_channels,), dtype=dtype, minval=-bound, maxval=bound)

    def _conv1x1_nchw(self, x):
        # x: (B, Cin, H, W) -> (B, Cout, Ho, Wo)
        st = self.spatial_upsample
        if st != 1:
            # 1x1 kernel with stride st simply subsamples the spatial grid.
            # TODO(synk): fold this subsample into the kernel (Mosaic strided
            # loads require a unit lane stride, so the W-stride needs a
            # selection-matmul / gather kernel); the wrapper slice costs one
            # extra HBM pass on stride>1 paths only.
            x = x[:, :, ::st, ::st]
        b, cin, h, w = x.shape
        x3d = x.reshape(b, cin, h * w)            # view-like flatten, NCHW kept
        out3d = _conv1x1_spatial_last(x3d, self.weight, self.bias)
        return out3d.reshape(b, self.output_channels, h, w)

    def __call__(self, inputs):
        if inputs.ndim == 5:
            # (B, T, C, H, W): fold T into batch — identical to the per-t loop,
            # and feeds the batch-blocked kernel bigger bursts.
            b, t, c, h, w = inputs.shape
            out = self._conv1x1_nchw(inputs.reshape(b * t, c, h, w))
            _, co, ho, wo = out.shape
            return out.reshape(b, t, co, ho, wo)
        return self._conv1x1_nchw(inputs)


# ---------------------------------- Test ----------------------------------- #
if __name__ == "__main__":
    key = jax.random.PRNGKey(0)
    k_x4, k_x5, k_params = jax.random.split(key, 3)

    cin, cout = 12, 4
    decoder = ImageDecoderConv1x1(spatial_upsample=1, output_channels=cout,
                                  input_channels=cin, key=k_params)
    fwd = jax.jit(decoder.__call__)

    # 4-D input: (B, Cin, H, W)
    x4 = jax.random.normal(k_x4, (2, cin, 16, 16), dtype=jnp.float32)
    out4 = jax.block_until_ready(fwd(x4))
    assert out4.shape == (2, cout, 16, 16), out4.shape

    # 5-D input: (B, T, Cin, H, W)
    x5 = jax.random.normal(k_x5, (2, 3, cin, 16, 16), dtype=jnp.float32)
    out5 = jax.block_until_ready(fwd(x5))
    assert out5.shape == (2, 3, cout, 16, 16), out5.shape

    # Reference check in plain JAX (einsum = 1x1 conv), weight is (Cout, Cin).
    ref4 = jnp.einsum("bchw,oc->bohw", x4, decoder.weight) + \
        decoder.bias[None, :, None, None]
    assert jnp.allclose(out4, ref4, atol=1e-5, rtol=1e-5)
    ref5 = jnp.einsum("btchw,oc->btohw", x5, decoder.weight) + \
        decoder.bias[None, None, :, None, None]
    assert jnp.allclose(out5, ref5, atol=1e-5, rtol=1e-5)

    # spatial_upsample (stride) > 1 path.
    decoder_s2 = ImageDecoderConv1x1(spatial_upsample=2, output_channels=cout,
                                     input_channels=cin, key=k_params)
    out4_s2 = jax.block_until_ready(jax.jit(decoder_s2.__call__)(x4))
    assert out4_s2.shape == (2, cout, 8, 8), out4_s2.shape
    ref4_s2 = jnp.einsum("bchw,oc->bohw", x4[:, :, ::2, ::2], decoder_s2.weight) + \
        decoder_s2.bias[None, :, None, None]
    assert jnp.allclose(out4_s2, ref4_s2, atol=1e-5, rtol=1e-5)

    print("KERNEL_OK")
</pallas_src>

<mosaic_0001>
module attributes {stable_mosaic.version = 11 : i64} {
  func.func @_conv1x1_kernel(%arg0: i32, %arg1: i32, %arg2: memref<1x12x256xf32, #tpu.memory_space<vmem>>, %arg3: memref<4x12xf32, #tpu.memory_space<vmem>>, %arg4: memref<4x1xf32, #tpu.memory_space<vmem>>, %arg5: memref<1x4x256xf32, #tpu.memory_space<vmem>>) attributes {dimension_semantics = [#tpu.dimension_semantics<parallel>, #tpu.dimension_semantics<parallel>], iteration_bounds = array<i64: 2, 1>, scalar_prefetch = 0 : i64, scratch_operands = 0 : i64, tpu.core_type = #tpu.core_type<tc>, window_params = [{transform_indices = @transform_0, window_bounds = array<i64: 1, 12, 256>}, {pipeline_mode = #tpu.pipeline_mode<synchronous>, transform_indices = @transform_1, window_bounds = array<i64: 4, 12>}, {pipeline_mode = #tpu.pipeline_mode<synchronous>, transform_indices = @transform_2, window_bounds = array<i64: 4, 1>}, {transform_indices = @transform_3, window_bounds = array<i64: 1, 4, 256>}]} {
    %c0 = arith.constant 0 : index
    %c0_0 = arith.constant 0 : index
    %0 = vector.load %arg3[%c0, %c0_0] : memref<4x12xf32, #tpu.memory_space<vmem>>, vector<4x12xf32>
    %c0_1 = arith.constant 0 : index
    %c0_2 = arith.constant 0 : index
    %1 = vector.load %arg4[%c0_1, %c0_2] : memref<4x1xf32, #tpu.memory_space<vmem>>, vector<4x1xf32>
    %c0_3 = arith.constant 0 : index
    %c0_4 = arith.constant 0 : index
    %c0_5 = arith.constant 0 : index
    %2 = vector.load %arg2[%c0_3, %c0_4, %c0_5] : memref<1x12x256xf32, #tpu.memory_space<vmem>>, vector<1x12x256xf32>
    %3 = vector.shape_cast %2 : vector<1x12x256xf32> to vector<12x256xf32>
    %cst = arith.constant dense<0.000000e+00> : vector<4x256xf32>
    %4 = tpu.matmul %0, %3, %cst {dimension_numbers = #tpu.dot_dimension_numbers<[1], [0], [0], [1], [0, 0, 1, 1], [], []>} : vector<4x12xf32>, vector<12x256xf32>, vector<4x256xf32> -> vector<4x256xf32>
    %5 = vector.broadcast %1 : vector<4x1xf32> to vector<4x256xf32>
    %6 = arith.addf %4, %5 : vector<4x256xf32>
    %c0_6 = arith.constant 0 : index
    %c0_7 = arith.constant 0 : index
    %c0_8 = arith.constant 0 : index
    %7 = vector.load %arg5[%c0_6, %c0_7, %c0_8] : memref<1x4x256xf32, #tpu.memory_space<vmem>>, vector<1x4x256xf32>
    %8 = vector.shape_cast %7 : vector<1x4x256xf32> to vector<4x256xf32>
    %9 = vector.shape_cast %6 : vector<4x256xf32> to vector<1x4x256xf32>
    tpu.vector_store %arg5[%c0_6, %c0_7, %c0_8], %9 {strides = array<i32>} : memref<1x4x256xf32, #tpu.memory_space<vmem>>, vector<1x4x256xf32>,
    return
  }
  func.func @transform_0(%arg0: i32, %arg1: i32) -> (i32, i32, i32) {
    %c0_i32 = arith.constant 0 : i32
    %c0_i32_0 = arith.constant 0 : i32
    return %arg0, %c0_i32, %arg1 : i32, i32, i32
  }
  func.func @transform_1(%arg0: i32, %arg1: i32) -> (i32, i32) {
    %c0_i32 = arith.constant 0 : i32
    %c0_i32_0 = arith.constant 0 : i32
    %c0_i32_1 = arith.constant 0 : i32
    return %c0_i32, %c0_i32_0 : i32, i32
  }
  func.func @transform_2(%arg0: i32, %arg1: i32) -> (i32, i32) {
    %c0_i32 = arith.constant 0 : i32
    %c0_i32_0 = arith.constant 0 : i32
    %c0_i32_1 = arith.constant 0 : i32
    return %c0_i32, %c0_i32_0 : i32, i32
  }
  func.func @transform_3(%arg0: i32, %arg1: i32) -> (i32, i32, i32) {
    %c0_i32 = arith.constant 0 : i32
    %c0_i32_0 = arith.constant 0 : i32
    return %arg0, %c0_i32, %arg1 : i32, i32, i32
  }
}

</mosaic_0001>

<llo_original>
// kernel: a_call__.1
$region0: #{a_call__.1}
  #allocation0 [shape = 'u32[]', space=smem, size = 0x4, offset = 0x4, fixed_abs, tag = 'smem constant byte address 0x4 - core index']
  #allocation1 [shape = 'u32[144,128]{1,0:T(1,128)}', space=vmem, size = 0x12000, scoped, tag = 'internal scratch']
  %s0 = inlined_call_operand.vmem [shape: f32[2,12,256], index: 0, kind: input, shape index: {}]
  %s1 = inlined_call_operand.vmem [shape: f32[4,12], index: 1, kind: input, shape index: {}]
  %s2 = inlined_call_operand.vmem [shape: f32[4,1], index: 2, kind: input, shape index: {}]
  %s3 = inlined_call_operand.vmem [shape: f32[2,4,256], index: 3, kind: output, shape index: {}]
  %s4 = sld [smem:[#allocation0]]
  $region45: #{a_call__.1} parent=0
    _
  %s6 = ssub.s32 1, %s4
  %s7 = scalar_select 0, %s6, %s4
  loop: start=0, step=1, limit=4
  $region2: #{a_call__.1} parent=0 // loop_pre_header
    _
  $region3: #{a_call__.1} parent=0 // loop_header
    %s9 = sphi 0, %s13
    %p10 = scmp.ge.s32.totalorder %s9, 4
    %s16 = sphi 0, %s28
    %s17 = sphi 0, %s24
    %s18 = sphi 0, %s16
    %s19 = sphi 0, %s17
    %s20 = sphi 0, %s18
    %s21 = sphi 0, %s19
    %s33 = sphi 0, %s35
    %s36 = sphi 0, %s33
    %s37 = sphi 0, %s36
    %s53 = sphi 0, %s37
    %s57 = sphi 0, %s57
    %s59 = sphi 0, %s57
    %s60 = sphi 0, %s59
    %s74 = sphi 0, %s60
    %s78 = sphi 0, %s78
    %s80 = sphi 0, %s78
    %s81 = sphi 0, %s80
    %s95 = sphi 0, %s81
    %s103 = sphi 0, %s105
    %s106 = sphi 0, %s103
    %s107 = sphi 0, %s106
    %s123 = sphi 0, %s107
  $region4: #{a_call__.1} parent=0 // loop_header_branch
    %12 = sbr.rel (%p10) target = $region8
  $region5: #{a_call__.1} parent=0 // loop_body
    %s14 = ssub.s32 %s9, 1
    %s15 = ssub.s32 %s9, 2
    %s22 = sadd.s32 1, %s17
    %p23 = scmp.ge.s32.totalorder %s22, 1
    %s24 = scalar_select %p23, 0, %s22
    %s25 = sadd.s32 1, %s16
    %s26 = scalar_select %p23, %s25, %s16
    %p27 = scmp.ge.s32.totalorder %s26, 2
    %s28 = scalar_select %p27, 0, %s26
    %s29 = ssub.s32 %s16, %s28
    %s30 = ssub.s32 %s17, %s24
    %s31 = sor.u32 %s29, %s30
    %p32 = scmp.eq.s32.totalorder %s31, 0
    %s34 = sadd.s32 %s33, 1
    %s35 = scalar_select %p32, %s33, %s34
    %p38 = pneg %p32
    %p39 = scmp.eq.s32.totalorder %s9, 1
    %p40 = por %p38, %p39
    %p41 = scmp.ne.s32.totalorder %s33, %s36
    %p42 = scmp.eq.s32.totalorder %s9, 0
    %p43 = por %p41, %p42
    %p44 = scmp.ne.s32.totalorder %s33, %s36
    %p45 = scmp.eq.s32.totalorder %s14, 1
    %p46 = por %p44, %p45
    %p47 = scmp.ne.s32.totalorder %s36, %s37
    %p48 = scmp.eq.s32.totalorder %s14, 0
    %p49 = por %p47, %p48
    %p50 = scmp.ne.s32.totalorder %s36, %s37
    %p51 = scmp.eq.s32.totalorder %s15, 1
    %p52 = por %p50, %p51
    %p54 = scmp.ne.s32.totalorder %s37, %s53
    %p55 = scmp.eq.s32.totalorder %s15, 0
    %p56 = por %p54, %p55
    %s58 = sadd.s32 %s57, 1
    %p61 = scmp.eq.s32.totalorder %s9, 1
    %p62 = scmp.ne.s32.totalorder %s57, %s59
    %p63 = scmp.eq.s32.totalorder %s9, 0
    %p64 = por %p62, %p63
    %p65 = scmp.ne.s32.totalorder %s57, %s59
    %p66 = scmp.eq.s32.totalorder %s14, 1
    %p67 = por %p65, %p66
    %p68 = scmp.ne.s32.totalorder %s59, %s60
    %p69 = scmp.eq.s32.totalorder %s14, 0
    %p70 = por %p68, %p69
    %p71 = scmp.ne.s32.totalorder %s59, %s60
    %p72 = scmp.eq.s32.totalorder %s15, 1
    %p73 = por %p71, %p72
    %p75 = scmp.ne.s32.totalorder %s60, %s74
    %p76 = scmp.eq.s32.totalorder %s15, 0
    %p77 = por %p75, %p76
    %s79 = sadd.s32 %s78, 1
    %p82 = scmp.eq.s32.totalorder %s9, 1
    %p83 = scmp.ne.s32.totalorder %s78, %s80
    %p84 = scmp.eq.s32.totalorder %s9, 0
    %p85 = por %p83, %p84
    %p86 = scmp.ne.s32.totalorder %s78, %s80
    %p87 = scmp.eq.s32.totalorder %s14, 1
    %p88 = por %p86, %p87
    %p89 = scmp.ne.s32.totalorder %s80, %s81
    %p90 = scmp.eq.s32.totalorder %s14, 0
    %p91 = por %p89, %p90
    %p92 = scmp.ne.s32.totalorder %s80, %s81
    %p93 = scmp.eq.s32.totalorder %s15, 1
    %p94 = por %p92, %p93
    %p96 = scmp.ne.s32.totalorder %s81, %s95
    %p97 = scmp.eq.s32.totalorder %s15, 0
    %p98 = por %p96, %p97
    %s99 = ssub.s32 %s16, %s28
    %s100 = ssub.s32 %s17, %s24
    %s101 = sor.u32 %s99, %s100
    %p102 = scmp.eq.s32.totalorder %s101, 0
    %s104 = sadd.s32 %s103, 1
    %s105 = scalar_select %p102, %s103, %s104
    %p108 = pneg %p102
    %p109 = scmp.eq.s32.totalorder %s9, 1
    %p110 = por %p108, %p109
    %p111 = scmp.ne.s32.totalorder %s103, %s106
    %p112 = scmp.eq.s32.totalorder %s9, 0
    %p113 = por %p111, %p112
    %p114 = scmp.ne.s32.totalorder %s103, %s106
    %p115 = scmp.eq.s32.totalorder %s14, 1
    %p116 = por %p114, %p115
    %p117 = scmp.ne.s32.totalorder %s106, %s107
    %p118 = scmp.eq.s32.totalorder %s14, 0
    %p119 = por %p117, %p118
    %p120 = scmp.ne.s32.totalorder %s106, %s107
    %p121 = scmp.eq.s32.totalorder %s15, 1
    %p122 = por %p120, %p121
    %p124 = scmp.ne.s32.totalorder %s107, %s123
    %p125 = scmp.eq.s32.totalorder %s15, 0
    %p126 = por %p124, %p125
    %p127 = scmp.le.s32.totalorder 1, %s9
    %p128 = scmp.lt.s32.totalorder %s9, 3
    %p129 = pnand %p127, %p128
    %p130 = pneg %p129
    // Predicated region
    $region9: #{a_call__.1} parent=5 // pred_check
      _
    $region10: #{a_call__.1} parent=5 // pred_check_branch
      %132 = sbr.rel (%p129) target = $region12
    $region11: #{a_call__.1} parent=5 // pred_region
      %s133 = ssub.s32 %s9, 1
      // Predicated region
      $region13: #{a_call__.1} parent=11 // pred_check
        %p134 = pneg %p70
      $region14: #{a_call__.1} parent=11 // pred_check_branch
        %136 = sbr.rel (%p134) target = $region16
      $region15: #{a_call__.1} parent=11 // pred_region
        _
      $region16: #{a_call__.1} parent=11 // pred_fallthru
        _
      // Predicated region
      $region17: #{a_call__.1} parent=11 // pred_check
        %p137 = pneg %p91
      $region18: #{a_call__.1} parent=11 // pred_check_branch
        %139 = sbr.rel (%p137) target = $region20
      $region19: #{a_call__.1} parent=11 // pred_region
        _
      $region20: #{a_call__.1} parent=11 // pred_fallthru
        _
    $region12: #{a_call__.1} parent=5 // pred_fallthru
      _
    %p140 = scmp.lt.s32.totalorder %s9, 2
    // Predicated region
    $region21: #{a_call__.1} parent=5 // pred_check
      %p141 = pneg %p140
    $region22: #{a_call__.1} parent=5 // pred_check_branch
      %143 = sbr.rel (%p141) target = $region24
    $region23: #{a_call__.1} parent=5 // pred_region
      // Predicated region
      $region25: #{a_call__.1} parent=23 // pred_check
        %p144 = pneg %p43
      $region26: #{a_call__.1} parent=23 // pred_check_branch
        %146 = sbr.rel (%p144) target = $region28
      $region27: #{a_call__.1} parent=23 // pred_region
        %s147 = smul.u32 2, %s17
        %p148 = scmp.lt.s32.totalorder %s16, 1
        %s149 = scalar_select %p148, %s16, 1
        %p150 = scmp.lt.s32.totalorder %s147, 1
        %s151 = scalar_select %p150, %s147, 1
        %s152 = smul.addr %s149, 4
        %s153 = sadd.s32 %s151, %s152
        %s154 = smul.addr %s153, 8
        %s155 = scalar_lea.vmem %s0, %s154
        %s156 = smul.u32 2, %s17
      $region28: #{a_call__.1} parent=23 // pred_fallthru
        _
    $region24: #{a_call__.1} parent=5 // pred_fallthru
      _
    %p157 = scmp.le.s32.totalorder 1, %s9
    %p158 = scmp.lt.s32.totalorder %s9, 3
    %p159 = pnand %p157, %p158
    %p160 = pneg %p159
    // Predicated region
    $region29: #{a_call__.1} parent=5 // pred_check
      _
    $region30: #{a_call__.1} parent=5 // pred_check_branch
      %162 = sbr.rel (%p159) target = $region32
    $region31: #{a_call__.1} parent=5 // pred_region
      %s163 = ssub.s32 %s9, 1
      %s164 = smul.u32 2, %s19
      %p165 = scmp.lt.s32.totalorder %s18, 1
      %s166 = scalar_select %p165, %s18, 1
      %p167 = scmp.lt.s32.totalorder %s164, 1
      %s168 = scalar_select %p167, %s164, 1
      %s169 = smul.addr %s166, 4
      %s170 = sadd.s32 %s168, %s169
      %s171 = smul.addr %s170, 8
      %s172 = scalar_lea.vmem %s0, %s171
      %p173 = pneg %p49
      %p174 = pneg %p46
      %p175 = pneg %p70
      %p176 = pneg %p67
      %p177 = pneg %p91
      %p178 = pneg %p88
      %p179 = pneg %p119
      %p180 = pneg %p116
      %s181 = smul.u32 2, %s19
      %p182 = scmp.lt.s32.totalorder %s18, 1
      %s183 = scalar_select %p182, %s18, 1
      %p184 = scmp.lt.s32.totalorder %s181, 1
      %s185 = scalar_select %p184, %s181, 1
      %s186 = smul.addr %s183, 2
      %s187 = sadd.s32 %s185, %s186
      %s188 = smul.addr %s187, 4
      %s189 = scalar_lea.vmem %s3, %s188
      %s190 = smul.u32 2, %s19
      %p191 = scmp.lt.s32.totalorder %s18, 1
      %s192 = scalar_select %p191, %s18, 1
      %p193 = scmp.lt.s32.totalorder %s190, 1
      %s194 = scalar_select %p193, %s190, 1
      %s195 = smul.addr %s192, 4
      %s196 = sadd.s32 %s194, %s195
      %s197 = smul.addr %s196, 8
      %s198 = scalar_lea.vmem %s0, %s197
      %s199 = smul.u32 2, %s19
      %s200 = smul.u32 2, %s19
      %p201 = scmp.lt.s32.totalorder %s18, 1
      %s202 = scalar_select %p201, %s18, 1
      %p203 = scmp.lt.s32.totalorder %s200, 1
      %s204 = scalar_select %p203, %s200, 1
      %s205 = smul.addr %s202, 2
      %s206 = sadd.s32 %s204, %s205
      %s207 = smul.addr %s206, 4
      %s208 = scalar_lea.vmem %s3, %s207
      %s209 = smul.u32 2, %s19
      %v210 = vld [vmem:[%s1] sm:$0xf]
      %v211 = vld [vmem:[%s2] sm:$0xf]
      %v212 = vld [vmem:[%s198] sm:$0xff]
      %v213 = vld [vmem:[%s198 + $0x8] sm:$0xff]
      %v214 = vld [vmem:[%s198 + $0x10] sm:$0xf]
      %v215 = vld [vmem:[%s198 + $0x18] sm:$0xf]
      %217 = vset.pattern.permute.xlu0 0
      %218 = vperm.xlu0 %217, %v211
      %v219 = vpop.permute.xlu0 %218
      %vm221 = vcmask 97280
      %v223 = vsel %vm221, %v210, 0
      %vm225 = vcmask 1043456
      %v227 = vsel %vm225, %v214, 0
      %v230 = vsel %vm225, %v215, 0
      %232 = vmatprep.subr.mxu0 %v213
      %233 = vmatpush1.msra.mxu0 %v212
      %234 = vmatprep.subr.mxu0 %v230
      %235 = vmatpush1.msra.mxu0 %v227
      %236 = vmatprep.subr.mxu0 0.0
      %237 = vmatpush1.msra.mxu0 0.0
      %238 = vmatprep.subr.mxu0 0.0
      %239 = vmatpush1.msra.mxu0 0.0
      %240 = vmatprep.subr.mxu0 0.0
      %241 = vmatpush1.msra.mxu0 0.0
      %242 = vmatprep.subr.mxu0 0.0
      %243 = vmatpush1.msra.mxu0 0.0
      %244 = vmatprep.subr.mxu0 0.0
      %245 = vmatpush1.msra.mxu0 0.0
      %246 = vmatprep.subr.mxu0 0.0
      %247 = vmatpush1.msra.mxu0 0.0
      %248 = vmatprep.subr.mxu0 0.0
      %249 = vmatpush1.msra.mxu0 0.0
      %250 = vmatprep.subr.mxu0 0.0
      %251 = vmatpush1.msra.mxu0 0.0
      %252 = vmatprep.subr.mxu0 0.0
      %253 = vmatpush1.msra.mxu0 0.0
      %254 = vmatprep.subr.mxu0 0.0
      %255 = vmatpush1.msra.mxu0 0.0
      %256 = vmatprep.subr.mxu0 0.0
      %257 = vmatpush1.msra.mxu0 0.0
      %258 = vmatprep.subr.mxu0 0.0
      %259 = vmatpush1.msra.mxu0 0.0
      %260 = vmatprep.subr.mxu0 0.0
      %261 = vmatpush1.msra.mxu0 0.0
      %262 = vmatprep.subr.mxu0 0.0
      %263 = vmatpush1.msra.mxu0 0.0
      %264 = vmatprep.subr.mxu0 0.0
      %265 = vmatpush1.msra.mxu0 0.0
      %266 = vmatprep.subr.mxu0 0.0
      %267 = vmatpush1.msra.mxu0 0.0
      %268 = vmatprep.subr.mxu0 0.0
      %269 = vmatpush1.msra.mxu0 0.0
      %270 = vmatprep.subr.mxu0 0.0
      %271 = vmatpush1.msra.mxu0 0.0
      %272 = vmatprep.subr.mxu0 0.0
      %273 = vmatpush1.msra.mxu0 0.0
      %274 = vmatprep.subr.mxu0 0.0
      %275 = vmatpush1.msra.mxu0 0.0
      %276 = vmatprep.subr.mxu0 0.0
      %277 = vmatpush1.msra.mxu0 0.0
      %278 = vmatprep.subr.mxu0 0.0
      %279 = vmatpush1.msra.mxu0 0.0
      %280 = vmatprep.subr.mxu0 0.0
      %281 = vmatpush1.msra.mxu0 0.0
      %282 = vmatprep.subr.mxu0 0.0
      %283 = vmatpush1.msra.mxu0 0.0
      %284 = vmatprep.subr.mxu0 0.0
      %285 = vmatpush1.msra.mxu0 0.0
      %286 = vmatprep.subr.mxu0 0.0
      %287 = vmatpush1.msra.mxu0 0.0
      %288 = vmatprep.subr.mxu0 0.0
      %289 = vmatpush1.msra.mxu0 0.0
      %290 = vmatprep.subr.mxu0 0.0
      %291 = vmatpush1.msra.mxu0 0.0
      %292 = vmatprep.subr.mxu0 0.0
      %293 = vmatpush1.msra.mxu0 0.0
      %294 = vmatprep.subr.mxu0 0.0
      %295 = vmatpush1.msra.mxu0 0.0
      %296 = vmatprep.mubr.f32.mxu0 0.0
      %297 = vmatmul.mubr.f32.gmra.mrb[0].mxu0 %v223
      %v298 = vpop.f32.mrb[0].mxu0
      %v299 = vadd.f32 %v219, %v298
      %v300 = vpop.f32.mrb[0].mxu0
      %v301 = vadd.f32 %v219, %v300
      %302 = vdwg.mxu0
      %v305 = vcombine.low %v299, %v301
      %307 = vst [vmem:[%s208] sm:$0xff] %v305
      %s308 = smul.u32 2, %s19
      %p309 = scmp.lt.s32.totalorder %s18, 1
      %s310 = scalar_select %p309, %s18, 1
      %p311 = scmp.lt.s32.totalorder %s308, 1
      %s312 = scalar_select %p311, %s308, 1
      %s313 = smul.addr %s310, 2
      %s314 = sadd.s32 %s312, %s313
      %s315 = smul.addr %s314, 4
      %s316 = scalar_lea.vmem %s3, %s315
      // Predicated region
      $region33: #{a_call__.1} parent=31 // pred_check
        %p317 = pneg %p116
      $region34: #{a_call__.1} parent=31 // pred_check_branch
        %319 = sbr.rel (%p317) target = $region36
      $region35: #{a_call__.1} parent=31 // pred_region
        %s320 = smul.u32 2, %s19
      $region36: #{a_call__.1} parent=31 // pred_fallthru
        _
    $region32: #{a_call__.1} parent=5 // pred_fallthru
      _
    %p321 = scmp.le.s32.totalorder 2, %s9
    // Predicated region
    $region37: #{a_call__.1} parent=5 // pred_check
      %p322 = pneg %p321
    $region38: #{a_call__.1} parent=5 // pred_check_branch
      %324 = sbr.rel (%p322) target = $region40
    $region39: #{a_call__.1} parent=5 // pred_region
      %s325 = ssub.s32 %s9, 2
      // Predicated region
      $region41: #{a_call__.1} parent=39 // pred_check
        %p326 = pneg %p122
      $region42: #{a_call__.1} parent=39 // pred_check_branch
        %328 = sbr.rel (%p326) target = $region44
      $region43: #{a_call__.1} parent=39 // pred_region
        %s329 = smul.u32 2, %s21
        %p330 = scmp.lt.s32.totalorder %s20, 1
        %s331 = scalar_select %p330, %s20, 1
        %p332 = scmp.lt.s32.totalorder %s329, 1
        %s333 = scalar_select %p332, %s329, 1
        %s334 = smul.addr %s331, 2
        %s335 = sadd.s32 %s333, %s334
        %s336 = smul.addr %s335, 4
        %s337 = scalar_lea.vmem %s3, %s336
      $region44: #{a_call__.1} parent=39 // pred_fallthru
        _
    $region40: #{a_call__.1} parent=5 // pred_fallthru
      _
  $region6: #{a_call__.1} parent=0 // loop_footer
    %s13 = sadd.s32 1, %s9
  $region7: #{a_call__.1} parent=0 // loop_footer_branch
    %8 = sbr.rel target = $region3
  $region8: #{a_call__.1} parent=0 // loop_exit
    _

</llo_original>
